<compile_context>
chip_gen: v7x
topology: tpu7x:2x2x1
jax: 0.10.0
libtpu: 0.0.40
codegen_flags: <defaults>
</compile_context>

<pallas_src>
import functools
import numpy as np
import jax
import jax.numpy as jnp
from jax.experimental import pallas as pl
from jax.experimental.pallas import tpu as pltpu


def _round_up(x, m):
    return (x + m - 1) // m * m


def _tpu_vmem_capacity():
    try:
        return int(pltpu.get_tpu_info().vmem_capacity_bytes)
    except Exception:
        return 128 * 1024 * 1024


_VMEM_CAP = _tpu_vmem_capacity()
_VMEM_LIMIT = int(min(100 * 1024 * 1024, (_VMEM_CAP * 3) // 4))
_MAX_FINE_ROWS = 128 if _VMEM_CAP <= 64 * 1024 * 1024 else 256
_TM = 8192  # row tile for the GEMM-style kernels (K<=144, N<=32 -> few MB)


def _mosaic_params(*sem):
    return pltpu.CompilerParams(dimension_semantics=sem,
                                vmem_limit_bytes=_VMEM_LIMIT)


# ----------------------------------------------------------------------------
# Pallas kernels
# ----------------------------------------------------------------------------
def _conv_relu_kernel(cols_ref, w_ref, b_ref, o_ref):
    """One M-tile of an im2col conv: (tm,K)@(K,N) + bias, ReLU."""
    acc = jnp.dot(cols_ref[...], w_ref[...], preferred_element_type=jnp.float32)
    o_ref[...] = jnp.maximum(acc + b_ref[...], 0.0).astype(o_ref.dtype)


def _conv_suffix_kernel(cols_ref, w_ref, b_ref, wst_ref, bs_ref,
                        z_ref, stats_ref, *, m_total):
    """Fused encoder conv2 + 1x1 suffix conv (pre-BN) + masked BN partial stats.
    Output z is stored transposed (ns, tm) -> lane-dense stores."""
    f = jnp.dot(cols_ref[...], w_ref[...], preferred_element_type=jnp.float32)
    f = jnp.maximum(f + b_ref[...], 0.0)
    # z^T = ws^T @ f^T computed as an NT matmul (MXU, bf16 operands, f32 acc).
    zt = jax.lax.dot_general(wst_ref[...], f.astype(jnp.bfloat16),
                             dimension_numbers=(((1,), (1,)), ((), ())),
                             preferred_element_type=jnp.float32)
    zt = zt + bs_ref[...]
    z_ref[...] = zt
    tm = zt.shape[1]
    col = (jax.lax.broadcasted_iota(jnp.int32, (1, tm), 1)
           + pl.program_id(0) * tm)
    zm = jnp.where(col < m_total, zt, 0.0)            # mask padded rows
    stats_ref[...] = jnp.concatenate(
        [jnp.sum(zm, axis=1, keepdims=True),
         jnp.sum(zm * zm, axis=1, keepdims=True)], axis=1)[None]


def _bn_decoder_kernel(z_ref, scale_ref, shift_ref, wt_ref, b_ref, o_ref):
    """Fused BN-normalize + ReLU + decoder0/decoder1 (block-diagonal weight).
    Operates on transposed (ns, tm) blocks and writes (n_tree, tm) lane-dense."""
    z = jnp.maximum(z_ref[...] * scale_ref[...] + shift_ref[...], 0.0)
    o_ref[...] = (jnp.dot(wt_ref[...], z.astype(jnp.bfloat16),
                          preferred_element_type=jnp.float32) + b_ref[...])


def _render_loss_kernel(tp_ref, yt_ref, cw_ref, yp_ref, part_ref, *,
                        num_classes, nds, n_shape, ignore_index,
                        min_region_size, hf_valid):
    """Evaluate the depth-2 soft BSP tree for one (batch, coarse-row-tile) block
    and accumulate all loss partials on-chip.

    tp_ref  : (1, 1, n_tree*thf, Wf)  coarse tree params, channels grouped along
              sublanes (1/softmax_temperature already folded in).
    yt_ref  : (1, th, W) int32        ground-truth labels for this row block.
    cw_ref  : (1, C)                  per-class CE weights.
    yp_ref  : (1, C, th, W)           per-pixel class logits (NCHW block).
    part_ref: (1, 1, 8, 128)          scalar loss partials
              [ce_num, ce_den, dist_sum, size_sum, rm_sum] in lanes 0..4.
    """
    f32, bf16 = jnp.float32, jnp.bfloat16
    C = num_classes
    n_tree = n_shape + 4 * C
    wf = tp_ref.shape[3]
    thf = tp_ref.shape[2] // n_tree
    th, tw = thf * nds, wf * nds
    t = pl.program_id(1)

    def _tot(a):                                       # full sum -> (1, 1)
        return jnp.sum(jnp.sum(a, axis=1, keepdims=True), axis=0, keepdims=True)

    # 0/1 replication (upsample) and pooling matrices (exact in bf16).
    r_w = (jax.lax.broadcasted_iota(jnp.int32, (wf, tw), 1) // nds
           == jax.lax.broadcasted_iota(jnp.int32, (wf, tw), 0)).astype(bf16)
    r_h = (jax.lax.broadcasted_iota(jnp.int32, (th, thf), 0) // nds
           == jax.lax.broadcasted_iota(jnp.int32, (th, thf), 1)).astype(bf16)
    p_h = (jax.lax.broadcasted_iota(jnp.int32, (thf, th), 1) // nds
           == jax.lax.broadcasted_iota(jnp.int32, (thf, th), 0)).astype(bf16)
    p_w = (jax.lax.broadcasted_iota(jnp.int32, (tw, wf), 0) // nds
           == jax.lax.broadcasted_iota(jnp.int32, (tw, wf), 1)).astype(bf16)

    # In-cell sample points (2k+1)/(2n), broadcastable rows/columns.
    inv2n = 1.0 / (2.0 * nds)
    xs = (2.0 * (jax.lax.broadcasted_iota(jnp.int32, (1, tw), 1) % nds
                 ).astype(f32) + 1.0) * inv2n          # (1, tw)
    ys = (2.0 * (jax.lax.broadcasted_iota(jnp.int32, (th, 1), 0) % nds
                 ).astype(f32) + 1.0) * inv2n          # (th, 1)

    # Batched nearest-neighbour upsample: ONE width matmul for all channels,
    # then one small height matmul per channel.
    tp_flat = tp_ref[0, 0].astype(bf16)                # (n_tree*thf, wf)
    wide = jnp.dot(tp_flat, r_w, preferred_element_type=f32).astype(bf16)

    def up(ci):                                        # (th, tw) f32
        return jnp.dot(r_h, wide[ci * thf:(ci + 1) * thf],
                       preferred_element_type=f32)

    def node(i):
        d = up(3 * i) * xs + up(3 * i + 1) * ys + up(3 * i + 2)
        return jax.nn.sigmoid(d)

    p0, p1, p2 = node(0), node(1), node(2)
    w0 = p0 * p1
    w1 = p0 * (1.0 - p1)
    w2 = (1.0 - p0) * p2
    w3 = (1.0 - p0) * (1.0 - p2)
    leaves = (w0, w1, w2, w3)

    # Per-pixel class logits (kept live for the fused CE loss).
    yp_planes = []
    for cls in range(C):
        acc = leaves[0] * up(n_shape + cls)
        for leaf in range(1, 4):
            acc = acc + leaves[leaf] * up(n_shape + leaf * C + cls)
        yp_ref[0, cls] = acc
        yp_planes.append(acc)

    # ----- fused losses -----------------------------------------------------
    yt = yt_ref[0]                                     # (th, tw) int32
    row_ok = ((jax.lax.broadcasted_iota(jnp.int32, (th, 1), 0) + t * th)
              < hf_valid * nds).astype(f32)            # padded fine rows -> 0
    crow_ok = ((jax.lax.broadcasted_iota(jnp.int32, (thf, 1), 0) + t * thf)
               < hf_valid).astype(f32)                 # padded coarse rows -> 0
    valid = (yt != ignore_index).astype(f32) * row_ok
    cw = cw_ref[...]                                   # (1, C)

    oh = [(yt == cls).astype(f32) * valid for cls in range(C)]
    w_pix = oh[0] * cw[:, 0:1]
    for cls in range(1, C):
        w_pix = w_pix + oh[cls] * cw[:, cls:cls + 1]

    # pixel cross-entropy: sum(w * (lse - picked)) / sum(w)
    mx = yp_planes[0]
    for cls in range(1, C):
        mx = jnp.maximum(mx, yp_planes[cls])
    sexp = jnp.exp(yp_planes[0] - mx)
    picked = oh[0] * yp_planes[0]
    for cls in range(1, C):
        sexp = sexp + jnp.exp(yp_planes[cls] - mx)
        picked = picked + oh[cls] * yp_planes[cls]
    lse = jnp.log(sexp) + mx
    ce_num = _tot(w_pix * (lse - picked))
    ce_den = _tot(w_pix)

    # region-map gini loss over fine pixels
    rm_sq = w0 * w0 + w1 * w1 + w2 * w2 + w3 * w3
    rm_sum = _tot((1.0 - rm_sq) * row_ok)

    # fine -> coarse pooling (height matmul first: far fewer MACs)
    def pool(a):                                       # (th,tw) f32 -> (thf,wf)
        h = jnp.dot(p_h, a.astype(bf16), preferred_element_type=f32)
        return jnp.dot(h.astype(bf16), p_w, preferred_element_type=f32)

    inv_n2 = 1.0 / float(nds * nds)
    dist_sum = jnp.zeros((1, 1), f32)
    size_sum = jnp.zeros((1, 1), f32)
    for leaf in range(4):
        rm_l = leaves[leaf]
        denom = pool(rm_l * valid)
        s_l = pool(rm_l) * inv_n2
        psq = jnp.zeros((thf, wf), f32)
        for cls in range(C):
            p_lc = pool(rm_l * oh[cls]) / (denom + 1e-8)
            psq = psq + p_lc * p_lc
        dist_sum = dist_sum + _tot((1.0 - psq) * crow_ok)
        size_sum = size_sum + _tot(
            jnp.maximum(min_region_size - s_l, 0.0) * crow_ok)

    vals = (ce_num, ce_den, dist_sum, size_sum, rm_sum)
    lane8 = jax.lax.broadcasted_iota(jnp.int32, (8, 128), 1)
    vec = jnp.zeros((8, 128), f32)
    for i, v in enumerate(vals):
        vec = vec + jnp.where(lane8 == i, v, 0.0)
    part_ref[0, 0] = vec


# ----------------------------------------------------------------------------
# pallas_call wrappers
# ----------------------------------------------------------------------------
def conv_relu(cols, w, b, out_dtype=jnp.bfloat16, tm=_TM):
    m, k = cols.shape
    n = w.shape[1]
    tm = min(tm, _round_up(m, 16))
    mp = _round_up(m, tm)
    if mp != m:
        cols = jnp.pad(cols, ((0, mp - m), (0, 0)))
    out = pl.pallas_call(
        _conv_relu_kernel,
        out_shape=jax.ShapeDtypeStruct((mp, n), out_dtype),
        grid=(mp // tm,),
        in_specs=[pl.BlockSpec((tm, k), lambda i: (i, 0)),
                  pl.BlockSpec((k, n), lambda i: (0, 0)),
                  pl.BlockSpec((1, n), lambda i: (0, 0))],
        out_specs=pl.BlockSpec((tm, n), lambda i: (i, 0)),
        compiler_params=_mosaic_params("parallel"),
    )(cols, w.astype(jnp.bfloat16), b.reshape(1, -1))
    return out[:m]


def encoder_suffix(cols, conv_w, conv_b, suf_w, suf_b, tm=_TM):
    m, k = cols.shape
    n_mid = conv_w.shape[1]
    ns = suf_w.shape[1]
    tm = min(tm, _round_up(m, 16))
    mp = _round_up(m, tm)
    if mp != m:
        cols = jnp.pad(cols, ((0, mp - m), (0, 0)))
    n_tiles = mp // tm
    z_t, stats = pl.pallas_call(
        functools.partial(_conv_suffix_kernel, m_total=m),
        out_shape=(jax.ShapeDtypeStruct((ns, mp), jnp.float32),
                   jax.ShapeDtypeStruct((n_tiles, ns, 2), jnp.float32)),
        grid=(n_tiles,),
        in_specs=[pl.BlockSpec((tm, k), lambda i: (i, 0)),
                  pl.BlockSpec((k, n_mid), lambda i: (0, 0)),
                  pl.BlockSpec((1, n_mid), lambda i: (0, 0)),
                  pl.BlockSpec((ns, n_mid), lambda i: (0, 0)),
                  pl.BlockSpec((ns, 1), lambda i: (0, 0))],
        out_specs=(pl.BlockSpec((ns, tm), lambda i: (0, i)),
                   pl.BlockSpec((1, ns, 2), lambda i: (i, 0, 0))),
        compiler_params=_mosaic_params("parallel"),
    )(cols,
      conv_w.astype(jnp.bfloat16), conv_b.reshape(1, -1),
      suf_w.T.astype(jnp.bfloat16), suf_b.reshape(-1, 1))
    return z_t, stats, tm, n_tiles


def bn_decoder(z_t, scale, shift, wt, b, tm, n_tiles):
    ns, mp = z_t.shape
    n_tree = wt.shape[0]
    return pl.pallas_call(
        _bn_decoder_kernel,
        out_shape=jax.ShapeDtypeStruct((n_tree, mp), jnp.float32),
        grid=(n_tiles,),
        in_specs=[pl.BlockSpec((ns, tm), lambda i: (0, i)),
                  pl.BlockSpec((ns, 1), lambda i: (0, 0)),
                  pl.BlockSpec((ns, 1), lambda i: (0, 0)),
                  pl.BlockSpec((n_tree, ns), lambda i: (0, 0)),
                  pl.BlockSpec((n_tree, 1), lambda i: (0, 0))],
        out_specs=pl.BlockSpec((n_tree, tm), lambda i: (0, i)),
        compiler_params=_mosaic_params("parallel"),
    )(z_t, scale, shift, wt, b)


def _pick_row_tile(hf, nds, max_fine_rows):
    """Coarse-row tile + padded coarse height; tile*nds <= max_fine_rows when
    tiling, and the tile is a multiple of 8 (padding + masking otherwise)."""
    if hf * nds <= max_fine_rows:
        return hf, hf
    best = 0
    for cand in range(min(hf, max(1, max_fine_rows // nds)), 0, -1):
        if cand % 8 == 0 and hf % cand == 0:
            best = cand
            break
    if best:
        return best, hf
    thf = max(8, (max(8, max_fine_rows // nds) // 8) * 8)
    return thf, _round_up(hf, thf)


def render_and_losses(tp_t, yt, class_weight, B, Hf, Wf, num_classes, nds,
                      n_shape, ignore_index, min_region_size):
    n_tree = n_shape + 4 * num_classes
    M = B * Hf * Wf
    H, W = Hf * nds, Wf * nds
    thf, hf_pad = _pick_row_tile(Hf, nds, _MAX_FINE_ROWS)
    T = hf_pad // thf
    th = thf * nds
    Hp = hf_pad * nds

    tpm = tp_t[:, :M].reshape(n_tree, B, Hf, Wf)
    if hf_pad != Hf:
        tpm = jnp.pad(tpm, ((0, 0), (0, 0), (0, hf_pad - Hf), (0, 0)))
        yt = jnp.pad(yt, ((0, 0), (0, Hp - H), (0, 0)))
    # Group coarse-row tiles outermost and stack channels along sublanes so the
    # kernel block is a single 2-D (n_tree*thf, Wf) slab (no in-kernel reshape).
    tpg = (tpm.reshape(n_tree, B, T, thf, Wf)
              .transpose(1, 2, 0, 3, 4)
              .reshape(B, T, n_tree * thf, Wf))

    kernel = functools.partial(
        _render_loss_kernel, num_classes=num_classes, nds=nds, n_shape=n_shape,
        ignore_index=int(ignore_index), min_region_size=float(min_region_size),
        hf_valid=Hf)
    yp, parts = pl.pallas_call(
        kernel,
        out_shape=(jax.ShapeDtypeStruct((B, num_classes, Hp, W), jnp.float32),
                   jax.ShapeDtypeStruct((B, T, 8, 128), jnp.float32)),
        grid=(B, T),
        in_specs=[pl.BlockSpec((1, 1, n_tree * thf, Wf),
                               lambda b, t: (b, t, 0, 0)),
                  pl.BlockSpec((1, th, W), lambda b, t: (b, t, 0)),
                  pl.BlockSpec((1, num_classes), lambda b, t: (0, 0))],
        out_specs=(pl.BlockSpec((1, num_classes, th, W),
                                lambda b, t: (b, 0, t, 0)),
                   pl.BlockSpec((1, 1, 8, 128), lambda b, t: (b, t, 0, 0))),
        compiler_params=_mosaic_params("parallel", "parallel"),
    )(tpg, yt.astype(jnp.int32),
      class_weight.reshape(1, -1).astype(jnp.float32))
    if Hp != H:
        yp = yp[:, :, :H, :]
    return yp, parts


# ----------------------------------------------------------------------------
# Plain-JAX glue
# ----------------------------------------------------------------------------
def im2col(x_nhwc, k, stride, pad):
    x = jnp.pad(x_nhwc, ((0, 0), (pad, pad), (pad, pad), (0, 0)))
    B, Hp, Wp, C = x.shape
    Ho = (Hp - k) // stride + 1
    Wo = (Wp - k) // stride + 1
    patches = []
    for di in range(k):
        for dj in range(k):
            patches.append(x[:, di:di + stride * Ho:stride,
                             dj:dj + stride * Wo:stride, :])
    cols = jnp.concatenate(patches, axis=-1)            # (B, Ho, Wo, k*k*C)
    return cols.reshape(B * Ho * Wo, k * k * C), (B, Ho, Wo)


def init_params(key, cin, num_classes):
    f1, f2 = 16, 32
    shape_feat, content_feat = 9, 16
    n_suffix = shape_feat + content_feat
    ks = jax.random.split(key, 8)

    def w(k, shape, scale=0.1):
        return scale * jax.random.normal(k, shape, dtype=jnp.float32)

    return {
        "conv1_w": w(ks[0], (3 * 3 * cin, f1)),
        "conv1_b": jnp.zeros((f1,), jnp.float32),
        "conv2_w": w(ks[1], (3 * 3 * f1, f2)),
        "conv2_b": jnp.zeros((f2,), jnp.float32),
        "suffix_w": w(ks[2], (f2, n_suffix)),
        "suffix_b": jnp.zeros((n_suffix,), jnp.float32),
        "suffix_gamma": jnp.ones((n_suffix,), jnp.float32),
        "suffix_beta": jnp.zeros((n_suffix,), jnp.float32),
        "dec0_w": w(ks[3], (shape_feat, 9)),             # 3 nodes x (a,b,c)
        "dec0_b": jnp.zeros((9,), jnp.float32),
        "dec1_w": w(ks[4], (content_feat, 4 * num_classes)),
        "dec1_b": jnp.zeros((4 * num_classes,), jnp.float32),
        "shape_feat": shape_feat,
        "content_feat": content_feat,
        "num_classes": num_classes,
    }


def segforestnet_forward(params, x_nchw, yt, weight, ignore_index,
                         softmax_temperature=1.0, min_region_size=0.01,
                         loss_weights=(0.2, 0.2, 0.2, 0.2, 0.2)):
    C = params["num_classes"]
    SF = params["shape_feat"]
    CF = params["content_feat"]
    n_shape = 9                                # 3 inner nodes x (a, b, c)
    n_tree = n_shape + 4 * C

    x = jnp.transpose(x_nchw, (0, 2, 3, 1)).astype(jnp.bfloat16)   # NHWC bf16
    B, H, W, _ = x.shape

    # --- encoder (Xception stub) conv1: im2col + M-tiled Pallas GEMM
    # TODO(synk): the two 3x3 stride-2 im2cols still run in XLA (9x inflation);
    #             halo-aware in-kernel tap gathering is left for a later pass.
    cols1, (_, H1, W1) = im2col(x, 3, 2, 1)
    f1 = conv_relu(cols1, params["conv1_w"], params["conv1_b"])
    f1 = f1.reshape(B, H1, W1, -1)

    # --- encoder conv2 + 1x1 suffix conv + BN partial stats (one kernel)
    cols2, (_, Hf, Wf) = im2col(f1, 3, 2, 1)
    m2 = cols2.shape[0]
    z_t, stats, tm2, n_tiles2 = encoder_suffix(
        cols2, params["conv2_w"], params["conv2_b"],
        params["suffix_w"], params["suffix_b"])
    nds = H // Hf                                        # downsampling factor

    # training-mode BN from the fused sum / sum-of-squares partials
    ssum = jnp.sum(stats, axis=0)                        # (ns, 2)
    mu = ssum[:, 0] / m2
    var = jnp.maximum(ssum[:, 1] / m2 - mu * mu, 0.0)
    inv_std = jax.lax.rsqrt(var + 1e-5)
    scale = (params["suffix_gamma"] * inv_std).reshape(-1, 1)
    shift = (params["suffix_beta"]
             - mu * params["suffix_gamma"] * inv_std).reshape(-1, 1)

    # --- decoder0/decoder1 fused behind BN via a block-diagonal weight;
    #     1/softmax_temperature folded into decoder0 (no per-pixel divide).
    inv_t = 1.0 / float(softmax_temperature)
    wt_bd = jnp.zeros((n_tree, SF + CF), jnp.float32)
    wt_bd = wt_bd.at[:n_shape, :SF].set((params["dec0_w"] * inv_t).T)
    wt_bd = wt_bd.at[n_shape:, SF:].set(params["dec1_w"].T)
    b_bd = jnp.concatenate([params["dec0_b"] * inv_t,
                            params["dec1_b"]]).reshape(-1, 1)
    tp_t = bn_decoder(z_t, scale, shift, wt_bd.astype(jnp.bfloat16), b_bd,
                      tm2, n_tiles2)                     # (n_tree, Mp)

    # --- render + fused losses
    yp, parts = render_and_losses(tp_t, yt, weight, B, Hf, Wf, C, nds, n_shape,
                                  ignore_index, min_region_size)

    psum = jnp.sum(parts[:, :, 0, :], axis=(0, 1))       # (128,)
    ce_loss = psum[0] / jnp.maximum(psum[1], 1e-8)
    l_dist = psum[2] / float(B * Hf * Wf * 4)
    l_size = psum[3] / float(B * 4 * Hf * Wf)
    l_rm = psum[4] / float(B * H * W)
    l_vq = 0.0  # TODO(synk): decoder-internal VQ losses unavailable (no source)

    lw = jnp.asarray(loss_weights, jnp.float32)
    lw = lw / jnp.sum(lw)
    loss = (lw[0] * ce_loss + lw[1] * l_dist + lw[2] * l_size
            + lw[3] * l_rm + lw[4] * l_vq)
    return yp, loss


if __name__ == "__main__":
    B, Cin, H, W = 2, 4, 16, 16
    num_classes = 5
    ignore_index = 4

    key = jax.random.PRNGKey(0)
    kx, ky, kp = jax.random.split(key, 3)
    x = jax.random.normal(kx, (B, Cin, H, W), dtype=jnp.float32)
    yt = jax.random.randint(ky, (B, H, W), 0, num_classes, dtype=jnp.int32)
    class_weight = jnp.ones((num_classes,), jnp.float32)

    params = init_params(kp, Cin, num_classes)

    yp, loss = segforestnet_forward(params, x, yt, class_weight, ignore_index)
    jax.block_until_ready((yp, loss))

    assert yp.shape == (B, num_classes, H, W)
    assert np.isfinite(float(loss))
    assert bool(jnp.all(jnp.isfinite(yp)))
    print("KERNEL_OK")
</pallas_src>

<mosaic_0001>
module attributes {stable_mosaic.version = 11 : i64} {
  func.func @_conv_relu_kernel(%arg0: i32, %arg1: memref<128x36xbf16, #tpu.memory_space<vmem>>, %arg2: memref<36x16xbf16, #tpu.memory_space<vmem>>, %arg3: memref<1x16xf32, #tpu.memory_space<vmem>>, %arg4: memref<128x16xbf16, #tpu.memory_space<vmem>>) attributes {dimension_semantics = [#tpu.dimension_semantics<parallel>], iteration_bounds = array<i64: 1>, scalar_prefetch = 0 : i64, scratch_operands = 0 : i64, tpu.core_type = #tpu.core_type<tc>, window_params = [{transform_indices = @transform_0, window_bounds = array<i64: 128, 36>}, {pipeline_mode = #tpu.pipeline_mode<synchronous>, transform_indices = @transform_1, window_bounds = array<i64: 36, 16>}, {pipeline_mode = #tpu.pipeline_mode<synchronous>, transform_indices = @transform_2, window_bounds = array<i64: 1, 16>}, {transform_indices = @transform_3, window_bounds = array<i64: 128, 16>}]} {
    %c0 = arith.constant 0 : index
    %c0_0 = arith.constant 0 : index
    %0 = vector.load %arg1[%c0, %c0_0] : memref<128x36xbf16, #tpu.memory_space<vmem>>, vector<128x36xbf16>
    %c0_1 = arith.constant 0 : index
    %c0_2 = arith.constant 0 : index
    %1 = vector.load %arg2[%c0_1, %c0_2] : memref<36x16xbf16, #tpu.memory_space<vmem>>, vector<36x16xbf16>
    %cst = arith.constant dense<0.000000e+00> : vector<128x16xf32>
    %2 = tpu.matmul %0, %1, %cst {dimension_numbers = #tpu.dot_dimension_numbers<[1], [0], [0], [1], [0, 0, 1, 1], [], []>} : vector<128x36xbf16>, vector<36x16xbf16>, vector<128x16xf32> -> vector<128x16xf32>
    %c0_3 = arith.constant 0 : index
    %c0_4 = arith.constant 0 : index
    %3 = vector.load %arg3[%c0_3, %c0_4] : memref<1x16xf32, #tpu.memory_space<vmem>>, vector<1x16xf32>
    %4 = vector.broadcast %3 : vector<1x16xf32> to vector<128x16xf32>
    %5 = arith.addf %2, %4 : vector<128x16xf32>
    %cst_5 = arith.constant 0.000000e+00 : f32
    %6 = vector.broadcast %cst_5 : f32 to vector<128x16xf32>
    %7 = arith.maximumf %5, %6 : vector<128x16xf32>
    %8 = arith.truncf %7 : vector<128x16xf32> to vector<128x16xbf16>
    %c0_6 = arith.constant 0 : index
    %c0_7 = arith.constant 0 : index
    %9 = vector.load %arg4[%c0_6, %c0_7] : memref<128x16xbf16, #tpu.memory_space<vmem>>, vector<128x16xbf16>
    tpu.vector_store %arg4[%c0_6, %c0_7], %8 {strides = array<i32>} : memref<128x16xbf16, #tpu.memory_space<vmem>>, vector<128x16xbf16>,
    return
  }
  func.func @transform_0(%arg0: i32) -> (i32, i32) {
    %c0_i32 = arith.constant 0 : i32
    %c0_i32_0 = arith.constant 0 : i32
    return %arg0, %c0_i32 : i32, i32
  }
  func.func @transform_1(%arg0: i32) -> (i32, i32) {
    %c0_i32 = arith.constant 0 : i32
    %c0_i32_0 = arith.constant 0 : i32
    %c0_i32_1 = arith.constant 0 : i32
    return %c0_i32, %c0_i32_0 : i32, i32
  }
  func.func @transform_2(%arg0: i32) -> (i32, i32) {
    %c0_i32 = arith.constant 0 : i32
    %c0_i32_0 = arith.constant 0 : i32
    %c0_i32_1 = arith.constant 0 : i32
    return %c0_i32, %c0_i32_0 : i32, i32
  }
  func.func @transform_3(%arg0: i32) -> (i32, i32) {
    %c0_i32 = arith.constant 0 : i32
    %c0_i32_0 = arith.constant 0 : i32
    return %arg0, %c0_i32 : i32, i32
  }
}

</mosaic_0001>

<llo_original>
// kernel: tpu_custom_call.1
$region0: #{tpu_custom_call.1}
  #allocation0 [shape = 'u32[]', space=smem, size = 0x4, offset = 0x4, fixed_abs, tag = 'smem constant byte address 0x4 - core index']
  #allocation1 [shape = 'u32[144,128]{1,0:T(1,128)}', space=vmem, size = 0x12000, scoped, tag = 'internal scratch']
  %s0 = inlined_call_operand.hbm [shape: bf16[128,36], index: 0, kind: input, shape index: {}]
  %s1 = inlined_call_operand.hbm [shape: bf16[36,16], index: 1, kind: input, shape index: {}]
  %s2 = inlined_call_operand.hbm [shape: f32[1,16], index: 2, kind: input, shape index: {}]
  %s3 = inlined_call_operand.hbm [shape: bf16[128,16], index: 3, kind: output, shape index: {}]
  %s4 = sld [smem:[#allocation0]]
  $region34: #{tpu_custom_call.1} parent=0
    _
  %s6 = ssub.s32 1, %s4
  %s7 = scalar_select 0, %s6, %s4
  $region1: #{tpu_custom_call.1} parent=0
    #allocation2 [shape = 'u8[32768]{0}', space=vmem, size = 0x8000, scoped, tag = 'input window, operand 0, single buffered']
    #allocation3 [shape = 's32[1]{0}', space=sflag, size = 0x4, scoped, tag = 'scoped memory for tpu_custom_call.1']
    #allocation4 [shape = 's32[1]{0}', space=sflag, size = 0x4, scoped, tag = 'scoped memory for tpu_custom_call.1']
    #allocation5 [shape = 'u8[10240]{0}', space=vmem, size = 0x2800, scoped, tag = 'input window, operand 1, single buffered']
    #allocation6 [shape = 's32[1]{0}', space=sflag, size = 0x4, scoped, tag = 'scoped memory for tpu_custom_call.1']
    #allocation7 [shape = 'u8[512]{0}', space=vmem, size = 0x400, scoped, tag = 'input window, operand 2, single buffered']
    #allocation8 [shape = 'u8[32768]{0}', space=vmem, size = 0x8000, scoped, tag = 'output window, operand 0, single buffered']
    %8 = vsyncpa [#allocation3], 0
    %9 = vsyncpa [#allocation6], 0
    %10 = vsyncpa [#allocation4], 0
    // Predicated region
    $region2: #{tpu_custom_call.1} parent=1 // pred_check
      _
    $region3: #{tpu_custom_call.1} parent=1 // pred_check_branch
      %12 = sbr.rel (0) target = $region5
    $region4: #{tpu_custom_call.1} parent=1 // pred_region
      %s14 = ssub.s32 1024, 1024
      %15 = vsyncadd [#allocation3], %s14
      %s16 = sshll.u32 [#allocation2], 4
      %s17 = int_to_ptr.vmem [resolvable:$true] %s16
      %22 = dma.hbm_to_vmem [thread:$0]  %s0, 1024, %s17, [#allocation3], 64, 64, 4
    $region5: #{tpu_custom_call.1} parent=1 // pred_fallthru
      _
    // Predicated region
    $region6: #{tpu_custom_call.1} parent=1 // pred_check
      _
    $region7: #{tpu_custom_call.1} parent=1 // pred_check_branch
      %24 = sbr.rel (0) target = $region9
    $region8: #{tpu_custom_call.1} parent=1 // pred_region
      %s26 = ssub.s32 320, 320
      %27 = vsyncadd [#allocation6], %s26
      %s28 = sshll.u32 [#allocation5], 4
      %s29 = int_to_ptr.vmem [resolvable:$true] %s28
      %34 = dma.hbm_to_vmem [thread:$0]  %s1, 320, %s29, [#allocation6], 64, 64, 4
    $region9: #{tpu_custom_call.1} parent=1 // pred_fallthru
      _
    // Predicated region
    $region10: #{tpu_custom_call.1} parent=1 // pred_check
      _
    $region11: #{tpu_custom_call.1} parent=1 // pred_check_branch
      %36 = sbr.rel (0) target = $region13
    $region12: #{tpu_custom_call.1} parent=1 // pred_region
      %s38 = ssub.s32 16, 16
      %39 = vsyncadd [#allocation6], %s38
      %s41 = sshll.u32 [#allocation7], 4
      %s42 = int_to_ptr.vmem [resolvable:$true] %s41
      %44 = dma.hbm_to_vmem [thread:$0]  %s2, 16, %s42, [#allocation6]
    $region13: #{tpu_custom_call.1} parent=1 // pred_fallthru
      _
    // Predicated region
    $region14: #{tpu_custom_call.1} parent=1 // pred_check
      _
    $region15: #{tpu_custom_call.1} parent=1 // pred_check_branch
      %46 = sbr.rel (0) target = $region17
    $region16: #{tpu_custom_call.1} parent=1 // pred_region
      %47 = dma.done [#allocation3], 1024
    $region17: #{tpu_custom_call.1} parent=1 // pred_fallthru
      _
    // Predicated region
    $region18: #{tpu_custom_call.1} parent=1 // pred_check
      _
    $region19: #{tpu_custom_call.1} parent=1 // pred_check_branch
      %49 = sbr.rel (0) target = $region21
    $region20: #{tpu_custom_call.1} parent=1 // pred_region
      %50 = dma.done [#allocation6], 320
    $region21: #{tpu_custom_call.1} parent=1 // pred_fallthru
      _
    // Predicated region
    $region22: #{tpu_custom_call.1} parent=1 // pred_check
      _
    $region23: #{tpu_custom_call.1} parent=1 // pred_check_branch
      %52 = sbr.rel (0) target = $region25
    $region24: #{tpu_custom_call.1} parent=1 // pred_region
      %53 = dma.done [#allocation6], 16
    $region25: #{tpu_custom_call.1} parent=1 // pred_fallthru
      _
    %v55 = vld [vmem:[#allocation2] sm:$0xf]
    %v56 = vld [vmem:[#allocation2 + $0x4] sm:$0xf]
    %v57 = vld [vmem:[#allocation2 + $0x8] sm:$0xf]
    %v58 = vld [vmem:[#allocation2 + $0xc] sm:$0xf]
    %v59 = vld [vmem:[#allocation2 + $0x10] sm:$0xf]
    %v60 = vld [vmem:[#allocation2 + $0x14] sm:$0xf]
    %v61 = vld [vmem:[#allocation2 + $0x18] sm:$0xf]
    %v62 = vld [vmem:[#allocation2 + $0x1c] sm:$0xf]
    %v63 = vld [vmem:[#allocation2 + $0x20] sm:$0xf]
    %v64 = vld [vmem:[#allocation2 + $0x24] sm:$0xf]
    %v65 = vld [vmem:[#allocation2 + $0x28] sm:$0xf]
    %v66 = vld [vmem:[#allocation2 + $0x2c] sm:$0xf]
    %v67 = vld [vmem:[#allocation2 + $0x30] sm:$0xf]
    %v68 = vld [vmem:[#allocation2 + $0x34] sm:$0xf]
    %v69 = vld [vmem:[#allocation2 + $0x38] sm:$0xf]
    %v70 = vld [vmem:[#allocation2 + $0x3c] sm:$0xf]
    %v71 = vld [vmem:[#allocation5] sm:$0xf]
    %v72 = vld [vmem:[#allocation5 + $0x4] sm:$0xf]
    %v73 = vld [vmem:[#allocation5 + $0x8] sm:$0xf]
    %v74 = vld [vmem:[#allocation5 + $0xc] sm:$0xf]
    %v75 = vld [vmem:[#allocation5 + $0x10] sm:$0x3]
    %v76 = vld [vmem:[#allocation7] sm:$0x1]
    %v78 = vlaneseq
    %v79 = vshrl.u32 %v78, 7
    %v80 = vsub.s32 0, %v79
    %v81 = vrot.slane %v76, %v80
    %v99 = vunpack.c.l.b16 %v55
    %v100 = vunpack.c.l.b16 %v56
    %v101 = vunpack.c.l.b16 %v57
    %v102 = vunpack.c.l.b16 %v58
    %v103 = vunpack.c.l.b16 %v59
    %v104 = vunpack.c.l.b16 %v60
    %v105 = vunpack.c.l.b16 %v61
    %v106 = vunpack.c.l.b16 %v62
    %v107 = vunpack.c.l.b16 %v63
    %v108 = vunpack.c.l.b16 %v64
    %v109 = vunpack.c.l.b16 %v65
    %v110 = vunpack.c.l.b16 %v66
    %v111 = vunpack.c.l.b16 %v67
    %v112 = vunpack.c.l.b16 %v68
    %v113 = vunpack.c.l.b16 %v69
    %v114 = vunpack.c.l.b16 %v70
    %v115 = vpack.c.b16 %v100, %v99
    %v116 = vpack.c.b16 %v102, %v101
    %v117 = vpack.c.b16 %v104, %v103
    %v118 = vpack.c.b16 %v106, %v105
    %v119 = vpack.c.b16 %v108, %v107
    %v120 = vpack.c.b16 %v110, %v109
    %v121 = vpack.c.b16 %v112, %v111
    %v122 = vpack.c.b16 %v114, %v113
    %v128 = vunpack.c.l.b16 %v71
    %v129 = vunpack.c.l.b16 %v72
    %v130 = vunpack.c.l.b16 %v73
    %v131 = vunpack.c.l.b16 %v74
    %v132 = vunpack.c.l.b16 %v75
    %v133 = vpack.c.b16 %v129, %v128
    %v134 = vpack.c.b16 %v131, %v130
    %v135 = vpack.c.b16 %v132, %v132
    %vm138 = vcmask 293888
    %v140 = vsel %vm138, %v115, 0
    %v143 = vsel %vm138, %v116, 0
    %v146 = vsel %vm138, %v117, 0
    %v149 = vsel %vm138, %v118, 0
    %v152 = vsel %vm138, %v119, 0
    %v155 = vsel %vm138, %v120, 0
    %v158 = vsel %vm138, %v121, 0
    %v161 = vsel %vm138, %v122, 0
    %vm163 = vcmask 1041408
    %v165 = vsel %vm163, %v135, 0
    %167 = vmatprep.subr.bf16.mxu0 0
    %168 = vmatpush1.bf16.msra.mxu0 %v133
    %169 = vmatprep.subr.bf16.mxu0 0
    %170 = vmatpush1.bf16.msra.mxu0 %v134
    %171 = vmatprep.subr.bf16.mxu0 0
    %172 = vmatpush1.bf16.msra.mxu0 %v165
    %173 = vmatprep.subr.bf16.mxu0 0
    %174 = vmatpush1.bf16.msra.mxu0 0
    %175 = vmatprep.subr.bf16.mxu0 0
    %176 = vmatpush1.bf16.msra.mxu0 0
    %177 = vmatprep.subr.bf16.mxu0 0
    %178 = vmatpush1.bf16.msra.mxu0 0
    %179 = vmatprep.subr.bf16.mxu0 0
    %180 = vmatpush1.bf16.msra.mxu0 0
    %181 = vmatprep.subr.bf16.mxu0 0
    %182 = vmatpush1.bf16.msra.mxu0 0
    %183 = vmatprep.subr.bf16.mxu0 0
    %184 = vmatpush1.bf16.msra.mxu0 0
    %185 = vmatprep.subr.bf16.mxu0 0
    %186 = vmatpush1.bf16.msra.mxu0 0
    %187 = vmatprep.subr.bf16.mxu0 0
    %188 = vmatpush1.bf16.msra.mxu0 0
    %189 = vmatprep.subr.bf16.mxu0 0
    %190 = vmatpush1.bf16.msra.mxu0 0
    %191 = vmatprep.subr.bf16.mxu0 0
    %192 = vmatpush1.bf16.msra.mxu0 0
    %193 = vmatprep.subr.bf16.mxu0 0
    %194 = vmatpush1.bf16.msra.mxu0 0
    %195 = vmatprep.subr.bf16.mxu0 0
    %196 = vmatpush1.bf16.msra.mxu0 0
    %197 = vmatprep.subr.bf16.mxu0 0
    %198 = vmatpush1.bf16.msra.mxu0 0
    %199 = vmatprep.mubr.bf16.mxu0 0
    %200 = vmatmul.mubr.bf16.gmra.mrb[0].mxu0 %v140
    %v201 = vpop.f32.mrb[0].mxu0
    %v202 = vadd.f32 %v81, %v201
    %v203 = vpop.f32.mrb[0].mxu0
    %v204 = vpop.f32.mrb[0].mxu0
    %v205 = vadd.f32 %v81, %v204
    %v206 = vpop.f32.mrb[0].mxu0
    %207 = vmatprep.mubr.bf16.mxu0 0
    %208 = vmatmul.mubr.bf16.gmra.mrb[0].mxu0 %v143
    %v209 = vpop.f32.mrb[0].mxu0
    %v210 = vadd.f32 %v81, %v209
    %v211 = vpop.f32.mrb[0].mxu0
    %v212 = vpop.f32.mrb[0].mxu0
    %v213 = vadd.f32 %v81, %v212
    %v214 = vpop.f32.mrb[0].mxu0
    %215 = vmatprep.mubr.bf16.mxu0 0
    %216 = vmatmul.mubr.bf16.gmra.mrb[0].mxu0 %v146
    %v217 = vpop.f32.mrb[0].mxu0
    %v218 = vadd.f32 %v81, %v217
    %v219 = vpop.f32.mrb[0].mxu0
    %v220 = vpop.f32.mrb[0].mxu0
    %v221 = vadd.f32 %v81, %v220
    %v222 = vpop.f32.mrb[0].mxu0
    %223 = vmatprep.mubr.bf16.mxu0 0
    %224 = vmatmul.mubr.bf16.gmra.mrb[0].mxu0 %v149
    %v225 = vpop.f32.mrb[0].mxu0
    %v226 = vadd.f32 %v81, %v225
    %v227 = vpop.f32.mrb[0].mxu0
    %v228 = vpop.f32.mrb[0].mxu0
    %v229 = vadd.f32 %v81, %v228
    %v230 = vpop.f32.mrb[0].mxu0
    %231 = vmatprep.mubr.bf16.mxu0 0
    %232 = vmatmul.mubr.bf16.gmra.mrb[0].mxu0 %v152
    %v233 = vpop.f32.mrb[0].mxu0
    %v234 = vadd.f32 %v81, %v233
    %v235 = vpop.f32.mrb[0].mxu0
    %v236 = vpop.f32.mrb[0].mxu0
    %v237 = vadd.f32 %v81, %v236
    %v238 = vpop.f32.mrb[0].mxu0
    %239 = vmatprep.mubr.bf16.mxu0 0
    %240 = vmatmul.mubr.bf16.gmra.mrb[0].mxu0 %v155
    %v241 = vpop.f32.mrb[0].mxu0
    %v242 = vadd.f32 %v81, %v241
    %v243 = vpop.f32.mrb[0].mxu0
    %v244 = vpop.f32.mrb[0].mxu0
    %v245 = vadd.f32 %v81, %v244
    %v246 = vpop.f32.mrb[0].mxu0
    %247 = vmatprep.mubr.bf16.mxu0 0
    %248 = vmatmul.mubr.bf16.gmra.mrb[0].mxu0 %v158
    %v249 = vpop.f32.mrb[0].mxu0
    %v250 = vadd.f32 %v81, %v249
    %v251 = vpop.f32.mrb[0].mxu0
    %v252 = vpop.f32.mrb[0].mxu0
    %v253 = vadd.f32 %v81, %v252
    %v254 = vpop.f32.mrb[0].mxu0
    %255 = vmatprep.mubr.bf16.mxu0 0
    %256 = vmatmul.mubr.bf16.gmra.mrb[0].mxu0 %v161
    %v257 = vpop.f32.mrb[0].mxu0
    %v258 = vadd.f32 %v81, %v257
    %v259 = vpop.f32.mrb[0].mxu0
    %v260 = vpop.f32.mrb[0].mxu0
    %v261 = vadd.f32 %v81, %v260
    %v262 = vpop.f32.mrb[0].mxu0
    %263 = vdwg.mxu0
    %v264 = vmax.f32 %v202, 0.0
    %v265 = vmax.f32 %v205, 0.0
    %v266 = vmax.f32 %v210, 0.0
    %v267 = vmax.f32 %v213, 0.0
    %v268 = vmax.f32 %v218, 0.0
    %v269 = vmax.f32 %v221, 0.0
    %v270 = vmax.f32 %v226, 0.0
    %v271 = vmax.f32 %v229, 0.0
    %v272 = vmax.f32 %v234, 0.0
    %v273 = vmax.f32 %v237, 0.0
    %v274 = vmax.f32 %v242, 0.0
    %v275 = vmax.f32 %v245, 0.0
    %v276 = vmax.f32 %v250, 0.0
    %v277 = vmax.f32 %v253, 0.0
    %v278 = vmax.f32 %v258, 0.0
    %v279 = vmax.f32 %v261, 0.0
    %v280 = vpack.c.bf16 %v265, %v264
    %v281 = vpack.c.bf16 %v267, %v266
    %v282 = vpack.c.bf16 %v269, %v268
    %v283 = vpack.c.bf16 %v271, %v270
    %v284 = vpack.c.bf16 %v273, %v272
    %v285 = vpack.c.bf16 %v275, %v274
    %v286 = vpack.c.bf16 %v277, %v276
    %v287 = vpack.c.bf16 %v279, %v278
    %v296 = vunpack.c.l.b16 %v280
    %v297 = vunpack.c.h.b16 %v280
    %v298 = vunpack.c.l.b16 %v281
    %v299 = vunpack.c.h.b16 %v281
    %v300 = vunpack.c.l.b16 %v282
    %v301 = vunpack.c.h.b16 %v282
    %v302 = vunpack.c.l.b16 %v283
    %v303 = vunpack.c.h.b16 %v283
    %v304 = vunpack.c.l.b16 %v284
    %v305 = vunpack.c.h.b16 %v284
    %v306 = vunpack.c.l.b16 %v285
    %v307 = vunpack.c.h.b16 %v285
    %v308 = vunpack.c.l.b16 %v286
    %v309 = vunpack.c.h.b16 %v286
    %v310 = vunpack.c.l.b16 %v287
    %v311 = vunpack.c.h.b16 %v287
    %v312 = vpack.c.b16 %v296, %v296
    %v313 = vpack.c.b16 %v297, %v297
    %v314 = vpack.c.b16 %v298, %v298
    %v315 = vpack.c.b16 %v299, %v299
    %v316 = vpack.c.b16 %v300, %v300
    %v317 = vpack.c.b16 %v301, %v301
    %v318 = vpack.c.b16 %v302, %v302
    %v319 = vpack.c.b16 %v303, %v303
    %v320 = vpack.c.b16 %v304, %v304
    %v321 = vpack.c.b16 %v305, %v305
    %v322 = vpack.c.b16 %v306, %v306
    %v323 = vpack.c.b16 %v307, %v307
    %v324 = vpack.c.b16 %v308, %v308
    %v325 = vpack.c.b16 %v309, %v309
    %v326 = vpack.c.b16 %v310, %v310
    %v327 = vpack.c.b16 %v311, %v311
    %vm344 = vcmask 125952
    %345 = vst.msk [vmem:[#allocation8] sm:$0xf] %vm344, %v312
    %346 = vst.msk [vmem:[#allocation8 + $0x4] sm:$0xf] %vm344, %v313
    %347 = vst.msk [vmem:[#allocation8 + $0x8] sm:$0xf] %vm344, %v314
    %348 = vst.msk [vmem:[#allocation8 + $0xc] sm:$0xf] %vm344, %v315
    %349 = vst.msk [vmem:[#allocation8 + $0x10] sm:$0xf] %vm344, %v316
    %350 = vst.msk [vmem:[#allocation8 + $0x14] sm:$0xf] %vm344, %v317
    %351 = vst.msk [vmem:[#allocation8 + $0x18] sm:$0xf] %vm344, %v318
    %352 = vst.msk [vmem:[#allocation8 + $0x1c] sm:$0xf] %vm344, %v319
    %353 = vst.msk [vmem:[#allocation8 + $0x20] sm:$0xf] %vm344, %v320
    %354 = vst.msk [vmem:[#allocation8 + $0x24] sm:$0xf] %vm344, %v321
    %355 = vst.msk [vmem:[#allocation8 + $0x28] sm:$0xf] %vm344, %v322
    %356 = vst.msk [vmem:[#allocation8 + $0x2c] sm:$0xf] %vm344, %v323
    %357 = vst.msk [vmem:[#allocation8 + $0x30] sm:$0xf] %vm344, %v324
    %358 = vst.msk [vmem:[#allocation8 + $0x34] sm:$0xf] %vm344, %v325
    %359 = vst.msk [vmem:[#allocation8 + $0x38] sm:$0xf] %vm344, %v326
    %360 = vst.msk [vmem:[#allocation8 + $0x3c] sm:$0xf] %vm344, %v327
    // Predicated region
    $region26: #{tpu_custom_call.1} parent=1 // pred_check
      _
    $region27: #{tpu_custom_call.1} parent=1 // pred_check_branch
      %362 = sbr.rel (0) target = $region29
    $region28: #{tpu_custom_call.1} parent=1 // pred_region
      %s364 = ssub.s32 1024, 1024
      %365 = vsyncadd [#allocation4], %s364
      %s366 = sshll.u32 [#allocation8], 4
      %s367 = int_to_ptr.vmem [resolvable:$true] %s366
      %372 = dma.vmem_to_hbm [thread:$0]  %s367, 1024, %s3, [#allocation4], 64, 64, 4
    $region29: #{tpu_custom_call.1} parent=1 // pred_fallthru
      _
    // Predicated region
    $region30: #{tpu_custom_call.1} parent=1 // pred_check
      _
    $region31: #{tpu_custom_call.1} parent=1 // pred_check_branch
      %374 = sbr.rel (0) target = $region33
    $region32: #{tpu_custom_call.1} parent=1 // pred_region
      %375 = dma.done [#allocation4], 1024
    $region33: #{tpu_custom_call.1} parent=1 // pred_fallthru
      _
    %376 = vsyncpa [#allocation3], 1
    %377 = vsyncpa [#allocation6], 1
    %378 = vsyncpa [#allocation4], 1

</llo_original>
